<compile_context>
chip_gen: v7x
topology: tpu7x:2x2x1
jax: 0.10.0
libtpu: 0.0.40
codegen_flags: <defaults>
</compile_context>

<pallas_src>
import math

import jax
import jax.numpy as jnp
from jax.experimental import pallas as pl
from jax.experimental.pallas import tpu as pltpu


def _cnode2_rk4_kernel(x0_ref, w1_ref, b1_ref, w2_ref, b2_ref, dts_ref, gate_ref,
                       out_ref, x_ref):
    """One RK4 step of the cNODE2 replicator ODE for one batch block.

    Grid: (batch_blocks, T-1).  Axis 0 'parallel', axis 1 'arbitrary' (time).

    x0_ref  : (bb, N) VMEM  initial state for this batch block
    w1_ref  : (N, N)  VMEM  Linear1 weight, pre-transposed to (in, out) - resident
    b1_ref  : (1, N)  VMEM  Linear1 bias                               - resident
    w2_ref  : (N, N)  VMEM  Linear2 weight, pre-transposed to (in, out) - resident
    b2_ref  : (1, N)  VMEM  Linear2 bias                               - resident
    dts_ref : (T-1,)  SMEM  time-step sizes
    gate_ref: (1,)    SMEM  scalar gate
    out_ref : (1, bb, N) VMEM  output time slice
    x_ref   : (bb, N) VMEM scratch -- state carry across time steps
    """
    s = pl.program_id(1)  # time-step index (sequential)

    @pl.when(s == 0)
    def _():
        x_ref[...] = x0_ref[...]

    w1 = w1_ref[...]
    b1 = b1_ref[...]
    w2 = w2_ref[...]
    b2 = b2_ref[...]
    gate = gate_ref[0]      # SMEM scalar
    dt = dts_ref[s]         # SMEM scalar

    def f(x):
        # f(x) = Linear2(Linear1(x)); MXU matmuls with f32 accumulation.
        h = jnp.dot(x, w1, preferred_element_type=jnp.float32) + b1
        fx = jnp.dot(h, w2, preferred_element_type=jnp.float32) + b2
        # replicator equation: x * (f(x) - <x, f(x)>)
        xT_fx = jnp.sum(x * fx, axis=-1, keepdims=True)
        return gate * (x * (fx - xT_fx))

    x = x_ref[...]
    k1 = f(x)
    k2 = f(x + (0.5 * dt) * k1)
    k3 = f(x + (0.5 * dt) * k2)
    k4 = f(x + dt * k3)
    x_new = x + (dt / 6.0) * (k1 + 2.0 * k2 + 2.0 * k3 + k4)

    x_ref[...] = x_new      # carry to next time step
    out_ref[0] = x_new      # write this time slice


def cnode2_fn_fitness_forward(t, x0, params):
    """Equivalent of cNODE2_FnFitness.forward(t, x): returns y of shape (T, B, N)."""
    w1t, b1, w2t, b2, gate = params
    T = int(t.shape[0])
    B, N = x0.shape
    if T <= 1:
        return x0[None]

    steps = T - 1
    dts = (t[1:] - t[:-1]).astype(jnp.float32)

    # Sublane-full batch block when possible; batch axis is megacore-parallel.
    bb = 8 if B % 8 == 0 else B
    nb = B // bb

    y_tail = pl.pallas_call(
        _cnode2_rk4_kernel,
        out_shape=jax.ShapeDtypeStruct((steps, B, N), jnp.float32),
        grid=(nb, steps),
        in_specs=[
            pl.BlockSpec((bb, N), lambda b, s: (b, 0)),            # x0
            pl.BlockSpec((N, N), lambda b, s: (0, 0)),             # W1^T (resident)
            pl.BlockSpec((1, N), lambda b, s: (0, 0)),             # b1   (resident)
            pl.BlockSpec((N, N), lambda b, s: (0, 0)),             # W2^T (resident)
            pl.BlockSpec((1, N), lambda b, s: (0, 0)),             # b2   (resident)
            pl.BlockSpec(memory_space=pltpu.MemorySpace.SMEM),     # dts
            pl.BlockSpec(memory_space=pltpu.MemorySpace.SMEM),     # gate
        ],
        out_specs=pl.BlockSpec((1, bb, N), lambda b, s: (s, b, 0)),
        scratch_shapes=[pltpu.VMEM((bb, N), jnp.float32)],         # x carry
        compiler_params=pltpu.CompilerParams(
            dimension_semantics=("parallel", "arbitrary"),
            vmem_limit_bytes=32 * 1024 * 1024,
        ),
        cost_estimate=pl.CostEstimate(
            flops=4 * steps * (2 * 2 * B * N * N),     # 4 RK4 stages x 2 matmuls
            transcendentals=0,
            bytes_accessed=(2 * N * N + 2 * N + B * N + steps + 1) * 4
                           + steps * B * N * 4,
        ),
    )(x0, w1t, b1, w2t, b2, dts, gate)

    return jnp.concatenate([x0[None], y_tail], axis=0)


def init_params(key, N, bias=True, identity_gate=False):
    """Deterministic init matching nn.Linear's default (uniform(-1/sqrt(N), 1/sqrt(N)))."""
    k1, k2, k3, k4 = jax.random.split(key, 4)
    bound = 1.0 / math.sqrt(N)
    # PyTorch Linear stores weight as (out, in); we pre-transpose to (in, out)
    # so the kernel computes x @ W^T with N on the lane axis.
    w1 = jax.random.uniform(k1, (N, N), jnp.float32, -bound, bound)
    w2 = jax.random.uniform(k2, (N, N), jnp.float32, -bound, bound)
    if bias:
        b1 = jax.random.uniform(k3, (1, N), jnp.float32, -bound, bound)
        b2 = jax.random.uniform(k4, (1, N), jnp.float32, -bound, bound)
    else:
        b1 = jnp.zeros((1, N), jnp.float32)
        b2 = jnp.zeros((1, N), jnp.float32)
    # identity_gate=True -> learnable gate initialized at 0.0 ; else buffer 1.0
    gate_val = 0.0 if identity_gate else 1.0
    gate = jnp.full((1,), gate_val, jnp.float32)
    return (w1.T, b1, w2.T, b2, gate)


def reference_forward(t, x0, params):
    """Pure-JAX reference (same fixed-step RK4) for a correctness check."""
    w1t, b1, w2t, b2, gate = params

    def f(x):
        fx = (x @ w1t + b1) @ w2t + b2
        xT_fx = jnp.sum(x * fx, axis=-1, keepdims=True)
        return gate[0] * (x * (fx - xT_fx))

    def rk4_step(x, dt):
        k1 = f(x)
        k2 = f(x + (0.5 * dt) * k1)
        k3 = f(x + (0.5 * dt) * k2)
        k4 = f(x + dt * k3)
        return x + (dt / 6.0) * (k1 + 2.0 * k2 + 2.0 * k3 + k4)

    def scan_body(x, dt):
        x_new = rk4_step(x, dt)
        return x_new, x_new

    _, ys = jax.lax.scan(scan_body, x0, t[1:] - t[:-1])
    return jnp.concatenate([x0[None], ys], axis=0)


if __name__ == "__main__":
    N = 128  # number of species (lane-dense feature dim of the two Linear(N, N) layers)
    B = 8    # batch (sublane-full)
    T = 5    # number of ODE time points

    key = jax.random.PRNGKey(0)
    k_x, k_p = jax.random.split(key)

    # cNODE inputs are compositions: nonnegative, rows sum to 1.
    x_raw = jax.random.uniform(k_x, (B, N), jnp.float32)
    x0 = x_raw / jnp.sum(x_raw, axis=-1, keepdims=True)

    t = jnp.linspace(0.0, 1.0, T).astype(jnp.float32)

    params = init_params(k_p, N, bias=True, identity_gate=False)

    y = jax.jit(cnode2_fn_fitness_forward)(t, x0, params)
    y = jax.block_until_ready(y)

    y_ref = reference_forward(t, x0, params)
    assert y.shape == (T, B, N)
    assert jnp.allclose(y, y_ref, atol=2e-5, rtol=1e-5), float(
        jnp.max(jnp.abs(y - y_ref)))

    print("KERNEL_OK")
</pallas_src>

<mosaic_0001>
module attributes {stable_mosaic.version = 11 : i64} {
  func.func @_cnode2_rk4_kernel(%arg0: i32, %arg1: i32, %arg2: memref<8x128xf32, #tpu.memory_space<vmem>>, %arg3: memref<128x128xf32, #tpu.memory_space<vmem>>, %arg4: memref<1x128xf32, #tpu.memory_space<vmem>>, %arg5: memref<128x128xf32, #tpu.memory_space<vmem>>, %arg6: memref<1x128xf32, #tpu.memory_space<vmem>>, %arg7: memref<4xf32, #tpu.memory_space<smem>>, %arg8: memref<1xf32, #tpu.memory_space<smem>>, %arg9: memref<1x8x128xf32, #tpu.memory_space<vmem>>, %arg10: memref<8x128xf32, #tpu.memory_space<vmem>>) attributes {dimension_semantics = [#tpu.dimension_semantics<parallel>, #tpu.dimension_semantics<arbitrary>], iteration_bounds = array<i64: 1, 4>, scalar_prefetch = 0 : i64, scratch_operands = 1 : i64, tpu.core_type = #tpu.core_type<tc>, window_params = [{transform_indices = @transform_0, window_bounds = array<i64: 8, 128>}, {pipeline_mode = #tpu.pipeline_mode<synchronous>, transform_indices = @transform_1, window_bounds = array<i64: 128, 128>}, {pipeline_mode = #tpu.pipeline_mode<synchronous>, transform_indices = @transform_2, window_bounds = array<i64: 1, 128>}, {pipeline_mode = #tpu.pipeline_mode<synchronous>, transform_indices = @transform_3, window_bounds = array<i64: 128, 128>}, {pipeline_mode = #tpu.pipeline_mode<synchronous>, transform_indices = @transform_4, window_bounds = array<i64: 1, 128>}, {transform_indices = @transform_5, window_bounds = array<i64: 4>}, {transform_indices = @transform_6, window_bounds = array<i64: 1>}, {transform_indices = @transform_7, window_bounds = array<i64: 1, 8, 128>}]} {
    %c0_i32 = arith.constant 0 : i32
    %0 = arith.cmpi eq, %arg1, %c0_i32 : i32
    %1 = arith.extui %0 : i1 to i32
    %c0_i32_0 = arith.constant 0 : i32
    %2 = arith.cmpi ne, %1, %c0_i32_0 : i32
    scf.if %2 {
      %c0_32 = arith.constant 0 : index
      %c0_33 = arith.constant 0 : index
      %93 = vector.load %arg2[%c0_32, %c0_33] : memref<8x128xf32, #tpu.memory_space<vmem>>, vector<8x128xf32>
      %c0_34 = arith.constant 0 : index
      %c0_35 = arith.constant 0 : index
      %94 = vector.load %arg10[%c0_34, %c0_35] : memref<8x128xf32, #tpu.memory_space<vmem>>, vector<8x128xf32>
      tpu.vector_store %arg10[%c0_34, %c0_35], %93 {strides = array<i32>} : memref<8x128xf32, #tpu.memory_space<vmem>>, vector<8x128xf32>,
    } else {
    }
    %c0 = arith.constant 0 : index
    %c0_1 = arith.constant 0 : index
    %3 = vector.load %arg3[%c0, %c0_1] : memref<128x128xf32, #tpu.memory_space<vmem>>, vector<128x128xf32>
    %c0_2 = arith.constant 0 : index
    %c0_3 = arith.constant 0 : index
    %4 = vector.load %arg4[%c0_2, %c0_3] : memref<1x128xf32, #tpu.memory_space<vmem>>, vector<1x128xf32>
    %c0_4 = arith.constant 0 : index
    %c0_5 = arith.constant 0 : index
    %5 = vector.load %arg5[%c0_4, %c0_5] : memref<128x128xf32, #tpu.memory_space<vmem>>, vector<128x128xf32>
    %c0_6 = arith.constant 0 : index
    %c0_7 = arith.constant 0 : index
    %6 = vector.load %arg6[%c0_6, %c0_7] : memref<1x128xf32, #tpu.memory_space<vmem>>, vector<1x128xf32>
    %c0_8 = arith.constant 0 : index
    %7 = memref.load %arg8[%c0_8] : memref<1xf32, #tpu.memory_space<smem>>
    %8 = arith.index_cast %arg1 : i32 to index
    %9 = memref.load %arg7[%8] : memref<4xf32, #tpu.memory_space<smem>>
    %c0_9 = arith.constant 0 : index
    %c0_10 = arith.constant 0 : index
    %10 = vector.load %arg10[%c0_9, %c0_10] : memref<8x128xf32, #tpu.memory_space<vmem>>, vector<8x128xf32>
    %cst = arith.constant dense<0.000000e+00> : vector<8x128xf32>
    %11 = tpu.matmul %10, %3, %cst {dimension_numbers = #tpu.dot_dimension_numbers<[1], [0], [0], [1], [0, 0, 1, 1], [], []>} : vector<8x128xf32>, vector<128x128xf32>, vector<8x128xf32> -> vector<8x128xf32>
    %12 = vector.broadcast %4 : vector<1x128xf32> to vector<8x128xf32>
    %13 = arith.addf %11, %12 : vector<8x128xf32>
    %cst_11 = arith.constant dense<0.000000e+00> : vector<8x128xf32>
    %14 = tpu.matmul %13, %5, %cst_11 {dimension_numbers = #tpu.dot_dimension_numbers<[1], [0], [0], [1], [0, 0, 1, 1], [], []>} : vector<8x128xf32>, vector<128x128xf32>, vector<8x128xf32> -> vector<8x128xf32>
    %15 = vector.broadcast %6 : vector<1x128xf32> to vector<8x128xf32>
    %16 = arith.addf %14, %15 : vector<8x128xf32>
    %17 = arith.mulf %10, %16 : vector<8x128xf32>
    %cst_12 = arith.constant dense<0.000000e+00> : vector<8xf32>
    %18 = vector.multi_reduction <add>, %17, %cst_12 [1] : vector<8x128xf32> to vector<8xf32>
    %19 = vector.shape_cast %18 : vector<8xf32> to vector<8x1xf32>
    %20 = vector.broadcast %19 : vector<8x1xf32> to vector<8x128xf32>
    %21 = arith.subf %16, %20 : vector<8x128xf32>
    %22 = arith.mulf %10, %21 : vector<8x128xf32>
    %23 = vector.broadcast %7 : f32 to vector<8x128xf32>
    %24 = arith.mulf %23, %22 : vector<8x128xf32>
    %cst_13 = arith.constant 5.000000e-01 : f32
    %25 = arith.mulf %cst_13, %9 : f32
    %26 = vector.broadcast %25 : f32 to vector<8x128xf32>
    %27 = arith.mulf %26, %24 : vector<8x128xf32>
    %28 = arith.addf %10, %27 : vector<8x128xf32>
    %cst_14 = arith.constant dense<0.000000e+00> : vector<8x128xf32>
    %29 = tpu.matmul %28, %3, %cst_14 {dimension_numbers = #tpu.dot_dimension_numbers<[1], [0], [0], [1], [0, 0, 1, 1], [], []>} : vector<8x128xf32>, vector<128x128xf32>, vector<8x128xf32> -> vector<8x128xf32>
    %30 = vector.broadcast %4 : vector<1x128xf32> to vector<8x128xf32>
    %31 = arith.addf %29, %30 : vector<8x128xf32>
    %cst_15 = arith.constant dense<0.000000e+00> : vector<8x128xf32>
    %32 = tpu.matmul %31, %5, %cst_15 {dimension_numbers = #tpu.dot_dimension_numbers<[1], [0], [0], [1], [0, 0, 1, 1], [], []>} : vector<8x128xf32>, vector<128x128xf32>, vector<8x128xf32> -> vector<8x128xf32>
    %33 = vector.broadcast %6 : vector<1x128xf32> to vector<8x128xf32>
    %34 = arith.addf %32, %33 : vector<8x128xf32>
    %35 = arith.mulf %28, %34 : vector<8x128xf32>
    %cst_16 = arith.constant dense<0.000000e+00> : vector<8xf32>
    %36 = vector.multi_reduction <add>, %35, %cst_16 [1] : vector<8x128xf32> to vector<8xf32>
    %37 = vector.shape_cast %36 : vector<8xf32> to vector<8x1xf32>
    %38 = vector.broadcast %37 : vector<8x1xf32> to vector<8x128xf32>
    %39 = arith.subf %34, %38 : vector<8x128xf32>
    %40 = arith.mulf %28, %39 : vector<8x128xf32>
    %41 = vector.broadcast %7 : f32 to vector<8x128xf32>
    %42 = arith.mulf %41, %40 : vector<8x128xf32>
    %cst_17 = arith.constant 5.000000e-01 : f32
    %43 = arith.mulf %cst_17, %9 : f32
    %44 = vector.broadcast %43 : f32 to vector<8x128xf32>
    %45 = arith.mulf %44, %42 : vector<8x128xf32>
    %46 = arith.addf %10, %45 : vector<8x128xf32>
    %cst_18 = arith.constant dense<0.000000e+00> : vector<8x128xf32>
    %47 = tpu.matmul %46, %3, %cst_18 {dimension_numbers = #tpu.dot_dimension_numbers<[1], [0], [0], [1], [0, 0, 1, 1], [], []>} : vector<8x128xf32>, vector<128x128xf32>, vector<8x128xf32> -> vector<8x128xf32>
    %48 = vector.broadcast %4 : vector<1x128xf32> to vector<8x128xf32>
    %49 = arith.addf %47, %48 : vector<8x128xf32>
    %cst_19 = arith.constant dense<0.000000e+00> : vector<8x128xf32>
    %50 = tpu.matmul %49, %5, %cst_19 {dimension_numbers = #tpu.dot_dimension_numbers<[1], [0], [0], [1], [0, 0, 1, 1], [], []>} : vector<8x128xf32>, vector<128x128xf32>, vector<8x128xf32> -> vector<8x128xf32>
    %51 = vector.broadcast %6 : vector<1x128xf32> to vector<8x128xf32>
    %52 = arith.addf %50, %51 : vector<8x128xf32>
    %53 = arith.mulf %46, %52 : vector<8x128xf32>
    %cst_20 = arith.constant dense<0.000000e+00> : vector<8xf32>
    %54 = vector.multi_reduction <add>, %53, %cst_20 [1] : vector<8x128xf32> to vector<8xf32>
    %55 = vector.shape_cast %54 : vector<8xf32> to vector<8x1xf32>
    %56 = vector.broadcast %55 : vector<8x1xf32> to vector<8x128xf32>
    %57 = arith.subf %52, %56 : vector<8x128xf32>
    %58 = arith.mulf %46, %57 : vector<8x128xf32>
    %59 = vector.broadcast %7 : f32 to vector<8x128xf32>
    %60 = arith.mulf %59, %58 : vector<8x128xf32>
    %61 = vector.broadcast %9 : f32 to vector<8x128xf32>
    %62 = arith.mulf %61, %60 : vector<8x128xf32>
    %63 = arith.addf %10, %62 : vector<8x128xf32>
    %cst_21 = arith.constant dense<0.000000e+00> : vector<8x128xf32>
    %64 = tpu.matmul %63, %3, %cst_21 {dimension_numbers = #tpu.dot_dimension_numbers<[1], [0], [0], [1], [0, 0, 1, 1], [], []>} : vector<8x128xf32>, vector<128x128xf32>, vector<8x128xf32> -> vector<8x128xf32>
    %65 = vector.broadcast %4 : vector<1x128xf32> to vector<8x128xf32>
    %66 = arith.addf %64, %65 : vector<8x128xf32>
    %cst_22 = arith.constant dense<0.000000e+00> : vector<8x128xf32>
    %67 = tpu.matmul %66, %5, %cst_22 {dimension_numbers = #tpu.dot_dimension_numbers<[1], [0], [0], [1], [0, 0, 1, 1], [], []>} : vector<8x128xf32>, vector<128x128xf32>, vector<8x128xf32> -> vector<8x128xf32>
    %68 = vector.broadcast %6 : vector<1x128xf32> to vector<8x128xf32>
    %69 = arith.addf %67, %68 : vector<8x128xf32>
    %70 = arith.mulf %63, %69 : vector<8x128xf32>
    %cst_23 = arith.constant dense<0.000000e+00> : vector<8xf32>
    %71 = vector.multi_reduction <add>, %70, %cst_23 [1] : vector<8x128xf32> to vector<8xf32>
    %72 = vector.shape_cast %71 : vector<8xf32> to vector<8x1xf32>
    %73 = vector.broadcast %72 : vector<8x1xf32> to vector<8x128xf32>
    %74 = arith.subf %69, %73 : vector<8x128xf32>
    %75 = arith.mulf %63, %74 : vector<8x128xf32>
    %76 = vector.broadcast %7 : f32 to vector<8x128xf32>
    %77 = arith.mulf %76, %75 : vector<8x128xf32>
    %cst_24 = arith.constant 6.000000e+00 : f32
    %78 = arith.divf %9, %cst_24 : f32
    %cst_25 = arith.constant 2.000000e+00 : f32
    %79 = vector.broadcast %cst_25 : f32 to vector<8x128xf32>
    %80 = arith.mulf %79, %42 : vector<8x128xf32>
    %81 = arith.addf %24, %80 : vector<8x128xf32>
    %cst_26 = arith.constant 2.000000e+00 : f32
    %82 = vector.broadcast %cst_26 : f32 to vector<8x128xf32>
    %83 = arith.mulf %82, %60 : vector<8x128xf32>
    %84 = arith.addf %81, %83 : vector<8x128xf32>
    %85 = arith.addf %84, %77 : vector<8x128xf32>
    %86 = vector.broadcast %78 : f32 to vector<8x128xf32>
    %87 = arith.mulf %86, %85 : vector<8x128xf32>
    %88 = arith.addf %10, %87 : vector<8x128xf32>
    %c0_27 = arith.constant 0 : index
    %c0_28 = arith.constant 0 : index
    %89 = vector.load %arg10[%c0_27, %c0_28] : memref<8x128xf32, #tpu.memory_space<vmem>>, vector<8x128xf32>
    tpu.vector_store %arg10[%c0_27, %c0_28], %88 {strides = array<i32>} : memref<8x128xf32, #tpu.memory_space<vmem>>, vector<8x128xf32>,
    %c0_29 = arith.constant 0 : index
    %c0_30 = arith.constant 0 : index
    %c0_31 = arith.constant 0 : index
    %90 = vector.load %arg9[%c0_29, %c0_30, %c0_31] : memref<1x8x128xf32, #tpu.memory_space<vmem>>, vector<1x8x128xf32>
    %91 = vector.shape_cast %90 : vector<1x8x128xf32> to vector<8x128xf32>
    %92 = vector.shape_cast %88 : vector<8x128xf32> to vector<1x8x128xf32>
    tpu.vector_store %arg9[%c0_29, %c0_30, %c0_31], %92 {strides = array<i32>} : memref<1x8x128xf32, #tpu.memory_space<vmem>>, vector<1x8x128xf32>,
    return
  }
  func.func @transform_0(%arg0: i32, %arg1: i32) -> (i32, i32) {
    %c0_i32 = arith.constant 0 : i32
    %c0_i32_0 = arith.constant 0 : i32
    return %arg0, %c0_i32 : i32, i32
  }
  func.func @transform_1(%arg0: i32, %arg1: i32) -> (i32, i32) {
    %c0_i32 = arith.constant 0 : i32
    %c0_i32_0 = arith.constant 0 : i32
    %c0_i32_1 = arith.constant 0 : i32
    return %c0_i32, %c0_i32_0 : i32, i32
  }
  func.func @transform_2(%arg0: i32, %arg1: i32) -> (i32, i32) {
    %c0_i32 = arith.constant 0 : i32
    %c0_i32_0 = arith.constant 0 : i32
    %c0_i32_1 = arith.constant 0 : i32
    return %c0_i32, %c0_i32_0 : i32, i32
  }
  func.func @transform_3(%arg0: i32, %arg1: i32) -> (i32, i32) {
    %c0_i32 = arith.constant 0 : i32
    %c0_i32_0 = arith.constant 0 : i32
    %c0_i32_1 = arith.constant 0 : i32
    return %c0_i32, %c0_i32_0 : i32, i32
  }
  func.func @transform_4(%arg0: i32, %arg1: i32) -> (i32, i32) {
    %c0_i32 = arith.constant 0 : i32
    %c0_i32_0 = arith.constant 0 : i32
    %c0_i32_1 = arith.constant 0 : i32
    return %c0_i32, %c0_i32_0 : i32, i32
  }
  func.func @transform_5(%arg0: i32, %arg1: i32) -> i32 {
    %c0_i32 = arith.constant 0 : i32
    %c0_i32_0 = arith.constant 0 : i32
    return %c0_i32 : i32
  }
  func.func @transform_6(%arg0: i32, %arg1: i32) -> i32 {
    %c0_i32 = arith.constant 0 : i32
    %c0_i32_0 = arith.constant 0 : i32
    return %c0_i32 : i32
  }
  func.func @transform_7(%arg0: i32, %arg1: i32) -> (i32, i32, i32) {
    %c0_i32 = arith.constant 0 : i32
    %c0_i32_0 = arith.constant 0 : i32
    return %arg1, %arg0, %c0_i32 : i32, i32, i32
  }
}

</mosaic_0001>

<llo_original>
// kernel: cnode2_fn_fitness_forward.1
$region0: #{cnode2_fn_fitness_forward.1}
  #allocation0 [shape = 'u32[]', space=smem, size = 0x4, offset = 0x4, fixed_abs, tag = 'smem constant byte address 0x4 - core index']
  #allocation1 [shape = 'u32[144,128]{1,0:T(1,128)}', space=vmem, size = 0x12000, scoped, tag = 'internal scratch']
  #allocation2 [shape = 'f32[8,128]{1,0:T(8,128)}', space=vmem, size = 0x1000, scoped, tag = 'scratch operand']
  #allocation3 [shape = 'f32[1]{0:T(128)S(6)}', space=smem, size = 0x200, scoped, tag = 'scoped memory for cnode2_fn_fitness_forward.1']
  %s0 = inlined_call_operand.vmem [shape: f32[8,128], index: 0, kind: input, shape index: {}]
  %s1 = inlined_call_operand.hbm [shape: f32[128,128], index: 1, kind: input, shape index: {}]
  %s2 = inlined_call_operand.vmem [shape: f32[1,128], index: 2, kind: input, shape index: {}]
  %s3 = inlined_call_operand.hbm [shape: f32[128,128], index: 3, kind: input, shape index: {}]
  %s4 = inlined_call_operand.vmem [shape: f32[1,128], index: 4, kind: input, shape index: {}]
  %s5 = inlined_call_operand.vmem [shape: f32[4], index: 5, kind: input, shape index: {}]
  %s6 = inlined_call_operand.<no memory space> [shape: f32[1], index: 6, kind: input, shape index: {}]
  %s7 = inlined_call_operand.vmem [shape: f32[4,8,128], index: 7, kind: output, shape index: {}]
  %s8 = sld [smem:[#allocation0]]
  $region77: #{cnode2_fn_fitness_forward.1} parent=0
    _
  %s10 = ssub.s32 1, %s8
  %s11 = scalar_select 0, %s10, %s8
  %12 = sst [smem:[#allocation3]] %s6
  $region1: #{cnode2_fn_fitness_forward.1} parent=0
    #allocation4 [shape = 'u8[65536]{0}', space=vmem, size = 0x10000, scoped, tag = 'input window, operand 1, single buffered']
    #allocation5 [shape = 's32[2]{0}', space=sflag, size = 0x8, scoped, tag = 'scoped memory for cnode2_fn_fitness_forward.1']
    #allocation6 [shape = 's32[2]{0}', space=sflag, size = 0x8, scoped, tag = 'scoped memory for cnode2_fn_fitness_forward.1']
    #allocation7 [shape = 'u8[65536]{0}', space=vmem, size = 0x10000, scoped, tag = 'input window, operand 3, single buffered']
    #allocation8 [shape = 's32[1]{0}', space=sflag, size = 0x4, scoped, tag = 'scoped memory for cnode2_fn_fitness_forward.1']
    #allocation9 [shape = 'u8[512]{0}', space=smem, size = 0x200, scoped, tag = 'input window, operand 5, single buffered']
    %13 = vsyncpa [#allocation5], 0
    %14 = vsyncpa [#allocation8], 0
    %15 = vsyncpa [#allocation6], 0
    loop: start=0, step=1, limit=6
    $region2: #{cnode2_fn_fitness_forward.1} parent=1 // loop_pre_header
      _
    $region3: #{cnode2_fn_fitness_forward.1} parent=1 // loop_header
      %s17 = sphi 0, %s21
      %p18 = scmp.ge.s32.totalorder %s17, 6
      %s24 = sphi 0, %s36
      %s25 = sphi 0, %s32
      %s26 = sphi 0, %s24
      %s27 = sphi 0, %s25
      %s28 = sphi 0, %s26
      %s29 = sphi 0, %s27
      %s39 = sphi 0, %s41
      %s42 = sphi 0, %s39
      %s43 = sphi 0, %s42
      %s59 = sphi 0, %s43
      %s63 = sphi 0, %s63
      %s65 = sphi 0, %s63
      %s66 = sphi 0, %s65
      %s80 = sphi 0, %s66
      %s84 = sphi 0, %s84
      %s86 = sphi 0, %s84
      %s87 = sphi 0, %s86
      %s101 = sphi 0, %s87
      %s105 = sphi 0, %s105
      %s107 = sphi 0, %s105
      %s108 = sphi 0, %s107
      %s122 = sphi 0, %s108
      %s126 = sphi 0, %s126
      %s128 = sphi 0, %s126
      %s129 = sphi 0, %s128
      %s143 = sphi 0, %s129
      %s147 = sphi 0, %s147
      %s149 = sphi 0, %s147
      %s150 = sphi 0, %s149
      %s164 = sphi 0, %s150
      %s168 = sphi 0, %s168
      %s170 = sphi 0, %s168
      %s171 = sphi 0, %s170
      %s185 = sphi 0, %s171
      %s193 = sphi 0, %s195
      %s196 = sphi 0, %s193
      %s197 = sphi 0, %s196
      %s213 = sphi 0, %s197
    $region4: #{cnode2_fn_fitness_forward.1} parent=1 // loop_header_branch
      %20 = sbr.rel (%p18) target = $region8
    $region5: #{cnode2_fn_fitness_forward.1} parent=1 // loop_body
      %s22 = ssub.s32 %s17, 1
      %s23 = ssub.s32 %s17, 2
      %s30 = sadd.s32 1, %s25
      %p31 = scmp.ge.s32.totalorder %s30, 4
      %s32 = scalar_select %p31, 0, %s30
      %s33 = sadd.s32 1, %s24
      %s34 = scalar_select %p31, %s33, %s24
      %p35 = scmp.ge.s32.totalorder %s34, 1
      %s36 = scalar_select %p35, 0, %s34
      %s37 = ssub.s32 %s24, %s36
      %p38 = scmp.eq.s32.totalorder %s37, 0
      %s40 = sadd.s32 %s39, 1
      %s41 = scalar_select %p38, %s39, %s40
      %p44 = pneg %p38
      %p45 = scmp.eq.s32.totalorder %s17, 3
      %p46 = por %p44, %p45
      %p47 = scmp.ne.s32.totalorder %s39, %s42
      %p48 = scmp.eq.s32.totalorder %s17, 0
      %p49 = por %p47, %p48
      %p50 = scmp.ne.s32.totalorder %s39, %s42
      %p51 = scmp.eq.s32.totalorder %s22, 3
      %p52 = por %p50, %p51
      %p53 = scmp.ne.s32.totalorder %s42, %s43
      %p54 = scmp.eq.s32.totalorder %s22, 0
      %p55 = por %p53, %p54
      %p56 = scmp.ne.s32.totalorder %s42, %s43
      %p57 = scmp.eq.s32.totalorder %s23, 3
      %p58 = por %p56, %p57
      %p60 = scmp.ne.s32.totalorder %s43, %s59
      %p61 = scmp.eq.s32.totalorder %s23, 0
      %p62 = por %p60, %p61
      %s64 = sadd.s32 %s63, 1
      %p67 = scmp.eq.s32.totalorder %s17, 3
      %p68 = scmp.ne.s32.totalorder %s63, %s65
      %p69 = scmp.eq.s32.totalorder %s17, 0
      %p70 = por %p68, %p69
      %p71 = scmp.ne.s32.totalorder %s63, %s65
      %p72 = scmp.eq.s32.totalorder %s22, 3
      %p73 = por %p71, %p72
      %p74 = scmp.ne.s32.totalorder %s65, %s66
      %p75 = scmp.eq.s32.totalorder %s22, 0
      %p76 = por %p74, %p75
      %p77 = scmp.ne.s32.totalorder %s65, %s66
      %p78 = scmp.eq.s32.totalorder %s23, 3
      %p79 = por %p77, %p78
      %p81 = scmp.ne.s32.totalorder %s66, %s80
      %p82 = scmp.eq.s32.totalorder %s23, 0
      %p83 = por %p81, %p82
      %s85 = sadd.s32 %s84, 1
      %p88 = scmp.eq.s32.totalorder %s17, 3
      %p89 = scmp.ne.s32.totalorder %s84, %s86
      %p90 = scmp.eq.s32.totalorder %s17, 0
      %p91 = por %p89, %p90
      %p92 = scmp.ne.s32.totalorder %s84, %s86
      %p93 = scmp.eq.s32.totalorder %s22, 3
      %p94 = por %p92, %p93
      %p95 = scmp.ne.s32.totalorder %s86, %s87
      %p96 = scmp.eq.s32.totalorder %s22, 0
      %p97 = por %p95, %p96
      %p98 = scmp.ne.s32.totalorder %s86, %s87
      %p99 = scmp.eq.s32.totalorder %s23, 3
      %p100 = por %p98, %p99
      %p102 = scmp.ne.s32.totalorder %s87, %s101
      %p103 = scmp.eq.s32.totalorder %s23, 0
      %p104 = por %p102, %p103
      %s106 = sadd.s32 %s105, 1
      %p109 = scmp.eq.s32.totalorder %s17, 3
      %p110 = scmp.ne.s32.totalorder %s105, %s107
      %p111 = scmp.eq.s32.totalorder %s17, 0
      %p112 = por %p110, %p111
      %p113 = scmp.ne.s32.totalorder %s105, %s107
      %p114 = scmp.eq.s32.totalorder %s22, 3
      %p115 = por %p113, %p114
      %p116 = scmp.ne.s32.totalorder %s107, %s108
      %p117 = scmp.eq.s32.totalorder %s22, 0
      %p118 = por %p116, %p117
      %p119 = scmp.ne.s32.totalorder %s107, %s108
      %p120 = scmp.eq.s32.totalorder %s23, 3
      %p121 = por %p119, %p120
      %p123 = scmp.ne.s32.totalorder %s108, %s122
      %p124 = scmp.eq.s32.totalorder %s23, 0
      %p125 = por %p123, %p124
      %s127 = sadd.s32 %s126, 1
      %p130 = scmp.eq.s32.totalorder %s17, 3
      %p131 = scmp.ne.s32.totalorder %s126, %s128
      %p132 = scmp.eq.s32.totalorder %s17, 0
      %p133 = por %p131, %p132
      %p134 = scmp.ne.s32.totalorder %s126, %s128
      %p135 = scmp.eq.s32.totalorder %s22, 3
      %p136 = por %p134, %p135
      %p137 = scmp.ne.s32.totalorder %s128, %s129
      %p138 = scmp.eq.s32.totalorder %s22, 0
      %p139 = por %p137, %p138
      %p140 = scmp.ne.s32.totalorder %s128, %s129
      %p141 = scmp.eq.s32.totalorder %s23, 3
      %p142 = por %p140, %p141
      %p144 = scmp.ne.s32.totalorder %s129, %s143
      %p145 = scmp.eq.s32.totalorder %s23, 0
      %p146 = por %p144, %p145
      %s148 = sadd.s32 %s147, 1
      %p151 = scmp.eq.s32.totalorder %s17, 3
      %p152 = scmp.ne.s32.totalorder %s147, %s149
      %p153 = scmp.eq.s32.totalorder %s17, 0
      %p154 = por %p152, %p153
      %p155 = scmp.ne.s32.totalorder %s147, %s149
      %p156 = scmp.eq.s32.totalorder %s22, 3
      %p157 = por %p155, %p156
      %p158 = scmp.ne.s32.totalorder %s149, %s150
      %p159 = scmp.eq.s32.totalorder %s22, 0
      %p160 = por %p158, %p159
      %p161 = scmp.ne.s32.totalorder %s149, %s150
      %p162 = scmp.eq.s32.totalorder %s23, 3
      %p163 = por %p161, %p162
      %p165 = scmp.ne.s32.totalorder %s150, %s164
      %p166 = scmp.eq.s32.totalorder %s23, 0
      %p167 = por %p165, %p166
      %s169 = sadd.s32 %s168, 1
      %p172 = scmp.eq.s32.totalorder %s17, 3
      %p173 = scmp.ne.s32.totalorder %s168, %s170
      %p174 = scmp.eq.s32.totalorder %s17, 0
      %p175 = por %p173, %p174
      %p176 = scmp.ne.s32.totalorder %s168, %s170
      %p177 = scmp.eq.s32.totalorder %s22, 3
      %p178 = por %p176, %p177
      %p179 = scmp.ne.s32.totalorder %s170, %s171
      %p180 = scmp.eq.s32.totalorder %s22, 0
      %p181 = por %p179, %p180
      %p182 = scmp.ne.s32.totalorder %s170, %s171
      %p183 = scmp.eq.s32.totalorder %s23, 3
      %p184 = por %p182, %p183
      %p186 = scmp.ne.s32.totalorder %s171, %s185
      %p187 = scmp.eq.s32.totalorder %s23, 0
      %p188 = por %p186, %p187
      %s189 = ssub.s32 %s25, %s32
      %s190 = ssub.s32 %s24, %s36
      %s191 = sor.u32 %s189, %s190
      %p192 = scmp.eq.s32.totalorder %s191, 0
      %s194 = sadd.s32 %s193, 1
      %s195 = scalar_select %p192, %s193, %s194
      %p198 = pneg %p192
      %p199 = scmp.eq.s32.totalorder %s17, 3
      %p200 = por %p198, %p199
      %p201 = scmp.ne.s32.totalorder %s193, %s196
      %p202 = scmp.eq.s32.totalorder %s17, 0
      %p203 = por %p201, %p202
      %p204 = scmp.ne.s32.totalorder %s193, %s196
      %p205 = scmp.eq.s32.totalorder %s22, 3
      %p206 = por %p204, %p205
      %p207 = scmp.ne.s32.totalorder %s196, %s197
      %p208 = scmp.eq.s32.totalorder %s22, 0
      %p209 = por %p207, %p208
      %p210 = scmp.ne.s32.totalorder %s196, %s197
      %p211 = scmp.eq.s32.totalorder %s23, 3
      %p212 = por %p210, %p211
      %p214 = scmp.ne.s32.totalorder %s197, %s213
      %p215 = scmp.eq.s32.totalorder %s23, 0
      %p216 = por %p214, %p215
      %p217 = scmp.le.s32.totalorder 1, %s17
      %p218 = scmp.lt.s32.totalorder %s17, 5
      %p219 = pnand %p217, %p218
      %p220 = pneg %p219
      // Predicated region
      $region9: #{cnode2_fn_fitness_forward.1} parent=5 // pred_check
        _
      $region10: #{cnode2_fn_fitness_forward.1} parent=5 // pred_check_branch
        %222 = sbr.rel (%p219) target = $region12
      $region11: #{cnode2_fn_fitness_forward.1} parent=5 // pred_region
        %s223 = ssub.s32 %s17, 1
        // Predicated region
        $region13: #{cnode2_fn_fitness_forward.1} parent=11 // pred_check
          %p224 = pneg %p55
        $region14: #{cnode2_fn_fitness_forward.1} parent=11 // pred_check_branch
          %226 = sbr.rel (%p224) target = $region16
        $region15: #{cnode2_fn_fitness_forward.1} parent=11 // pred_region
          %p227 = scmp.lt.s32.totalorder %s26, 0
          %s228 = scalar_select %p227, %s26, 0
          %s229 = smul.addr %s228, 8
          %s230 = scalar_lea.vmem %s0, %s229
        $region16: #{cnode2_fn_fitness_forward.1} parent=11 // pred_fallthru
          _
        // Predicated region
        $region17: #{cnode2_fn_fitness_forward.1} parent=11 // pred_check
          %p231 = pneg %p76
        $region18: #{cnode2_fn_fitness_forward.1} parent=11 // pred_check_branch
          %233 = sbr.rel (%p231) target = $region20
        $region19: #{cnode2_fn_fitness_forward.1} parent=11 // pred_region
          %s235 = ssub.s32 2048, 2048
          %236 = vsyncadd [#allocation5], %s235
          %s237 = sshll.u32 [#allocation4], 4
          %s238 = int_to_ptr.vmem [resolvable:$true] %s237
          %243 = dma.hbm_to_vmem [thread:$0]  %s1, 2048, %s238, [#allocation5], 128, 128, 8
        $region20: #{cnode2_fn_fitness_forward.1} parent=11 // pred_fallthru
          _
        // Predicated region
        $region21: #{cnode2_fn_fitness_forward.1} parent=11 // pred_check
          %p244 = pneg %p97
        $region22: #{cnode2_fn_fitness_forward.1} parent=11 // pred_check_branch
          %246 = sbr.rel (%p244) target = $region24
        $region23: #{cnode2_fn_fitness_forward.1} parent=11 // pred_region
          _
        $region24: #{cnode2_fn_fitness_forward.1} parent=11 // pred_fallthru
          _
        // Predicated region
        $region25: #{cnode2_fn_fitness_forward.1} parent=11 // pred_check
          %p247 = pneg %p118
        $region26: #{cnode2_fn_fitness_forward.1} parent=11 // pred_check_branch
          %249 = sbr.rel (%p247) target = $region28
        $region27: #{cnode2_fn_fitness_forward.1} parent=11 // pred_region
          %s251 = ssub.s32 2048, 2048
          %252 = vsyncadd [#allocation8], %s251
          %s253 = sshll.u32 [#allocation7], 4
          %s254 = int_to_ptr.vmem [resolvable:$true] %s253
          %259 = dma.hbm_to_vmem [thread:$0]  %s3, 2048, %s254, [#allocation8], 128, 128, 8
        $region28: #{cnode2_fn_fitness_forward.1} parent=11 // pred_fallthru
          _
        // Predicated region
        $region29: #{cnode2_fn_fitness_forward.1} parent=11 // pred_check
          %p260 = pneg %p139
        $region30: #{cnode2_fn_fitness_forward.1} parent=11 // pred_check_branch
          %262 = sbr.rel (%p260) target = $region32
        $region31: #{cnode2_fn_fitness_forward.1} parent=11 // pred_region
          _
        $region32: #{cnode2_fn_fitness_forward.1} parent=11 // pred_fallthru
          _
        // Predicated region
        $region33: #{cnode2_fn_fitness_forward.1} parent=11 // pred_check
          %p263 = pneg %p160
        $region34: #{cnode2_fn_fitness_forward.1} parent=11 // pred_check_branch
          %265 = sbr.rel (%p263) target = $region36
        $region35: #{cnode2_fn_fitness_forward.1} parent=11 // pred_region
          %s267 = ssub.s32 16, 16
          %268 = vsyncadd [#allocation6], %s267
          %s270 = sshll.u32 %s5, 4
          %s271 = int_to_ptr.vmem [resolvable:$true] %s270
          %273 = dma.vmem_to_smem %s271, 16, [#allocation9], [#allocation6]
        $region36: #{cnode2_fn_fitness_forward.1} parent=11 // pred_fallthru
          _
        // Predicated region
        $region37: #{cnode2_fn_fitness_forward.1} parent=11 // pred_check
          %p274 = pneg %p181
        $region38: #{cnode2_fn_fitness_forward.1} parent=11 // pred_check_branch
          %276 = sbr.rel (%p274) target = $region40
        $region39: #{cnode2_fn_fitness_forward.1} parent=11 // pred_region
          _
        $region40: #{cnode2_fn_fitness_forward.1} parent=11 // pred_fallthru
          _
      $region12: #{cnode2_fn_fitness_forward.1} parent=5 // pred_fallthru
        _
      %p277 = scmp.lt.s32.totalorder %s17, 4
      // Predicated region
      $region41: #{cnode2_fn_fitness_forward.1} parent=5 // pred_check
        %p278 = pneg %p277
      $region42: #{cnode2_fn_fitness_forward.1} parent=5 // pred_check_branch
        %280 = sbr.rel (%p278) target = $region44
      $region43: #{cnode2_fn_fitness_forward.1} parent=5 // pred_region
        _
      $region44: #{cnode2_fn_fitness_forward.1} parent=5 // pred_fallthru
        _
      %p281 = scmp.le.s32.totalorder 1, %s17
      %p282 = scmp.lt.s32.totalorder %s17, 5
      %p283 = pnand %p281, %p282
      %p284 = pneg %p283
      // Predicated region
      $region45: #{cnode2_fn_fitness_forward.1} parent=5 // pred_check
        _
      $region46: #{cnode2_fn_fitness_forward.1} parent=5 // pred_check_branch
        %286 = sbr.rel (%p283) target = $region48
      $region47: #{cnode2_fn_fitness_forward.1} parent=5 // pred_region
        %s287 = ssub.s32 %s17, 1
        // Predicated region
        $region49: #{cnode2_fn_fitness_forward.1} parent=47 // pred_check
          %p288 = pneg %p76
        $region50: #{cnode2_fn_fitness_forward.1} parent=47 // pred_check_branch
          %290 = sbr.rel (%p288) target = $region52
        $region51: #{cnode2_fn_fitness_forward.1} parent=47 // pred_region
          %291 = dma.done [#allocation5], 2048
        $region52: #{cnode2_fn_fitness_forward.1} parent=47 // pred_fallthru
          _
        // Predicated region
        $region53: #{cnode2_fn_fitness_forward.1} parent=47 // pred_check
          %p292 = pneg %p118
        $region54: #{cnode2_fn_fitness_forward.1} parent=47 // pred_check_branch
          %294 = sbr.rel (%p292) target = $region56
        $region55: #{cnode2_fn_fitness_forward.1} parent=47 // pred_region
          %295 = dma.done [#allocation8], 2048
        $region56: #{cnode2_fn_fitness_forward.1} parent=47 // pred_fallthru
          _
        // Predicated region
        $region57: #{cnode2_fn_fitness_forward.1} parent=47 // pred_check
          %p296 = pneg %p160
        $region58: #{cnode2_fn_fitness_forward.1} parent=47 // pred_check_branch
          %298 = sbr.rel (%p296) target = $region60
        $region59: #{cnode2_fn_fitness_forward.1} parent=47 // pred_region
          %299 = dma.done [#allocation6], 16
        $region60: #{cnode2_fn_fitness_forward.1} parent=47 // pred_fallthru
          _
        %300 = sfence
        %p301 = scmp.lt.s32.totalorder %s26, 0
        %s302 = scalar_select %p301, %s26, 0
        %s303 = smul.addr %s302, 8
        %s304 = scalar_lea.vmem %s0, %s303
        %p305 = pneg %p55
        %p306 = pneg %p52
        %p307 = pneg %p76
        %p308 = pneg %p73
        %p309 = pneg %p97
        %p310 = pneg %p94
        %p311 = pneg %p118
        %p312 = pneg %p115
        %p313 = pneg %p139
        %p314 = pneg %p136
        %p315 = pneg %p160
        %p316 = pneg %p157
        %p317 = pneg %p181
        %p318 = pneg %p178
        %p319 = pneg %p209
        %p320 = pneg %p206
        %p321 = scmp.lt.s32.totalorder %s27, 3
        %s322 = scalar_select %p321, %s27, 3
        %p323 = scmp.lt.s32.totalorder %s26, 0
        %s324 = scalar_select %p323, %s26, 0
        %s325 = sadd.s32 %s324, %s322
        %s326 = smul.addr %s325, 8
        %s327 = scalar_lea.vmem %s7, %s326
        %p328 = scmp.lt.s32.totalorder %s26, 0
        %s329 = scalar_select %p328, %s26, 0
        %s330 = smul.addr %s329, 8
        %s331 = scalar_lea.vmem %s0, %s330
        %p332 = scmp.lt.s32.totalorder %s27, 3
        %s333 = scalar_select %p332, %s27, 3
        %p334 = scmp.lt.s32.totalorder %s26, 0
        %s335 = scalar_select %p334, %s26, 0
        %s336 = sadd.s32 %s335, %s333
        %s337 = smul.addr %s336, 8
        %s338 = scalar_lea.vmem %s7, %s337
        %p339 = scmp.eq.s32.totalorder %s27, 0
        // Predicated region
        $region61: #{cnode2_fn_fitness_forward.1} parent=47 // pred_check
          %p340 = pneg %p339
        $region62: #{cnode2_fn_fitness_forward.1} parent=47 // pred_check_branch
          %342 = sbr.rel (%p340) target = $region64
        $region63: #{cnode2_fn_fitness_forward.1} parent=47 // pred_region
          %v343 = vld [vmem:[%s331] sm:$0xff]
          %344 = vst [vmem:[#allocation2] sm:$0xff] %v343
        $region64: #{cnode2_fn_fitness_forward.1} parent=47 // pred_fallthru
          _
        %v345 = vld [vmem:[#allocation4] sm:$0xff]
        %v346 = vld [vmem:[#allocation4 + $0x8] sm:$0xff]
        %v347 = vld [vmem:[#allocation4 + $0x10] sm:$0xff]
        %v348 = vld [vmem:[#allocation4 + $0x18] sm:$0xff]
        %v349 = vld [vmem:[#allocation4 + $0x20] sm:$0xff]
        %v350 = vld [vmem:[#allocation4 + $0x28] sm:$0xff]
        %v351 = vld [vmem:[#allocation4 + $0x30] sm:$0xff]
        %v352 = vld [vmem:[#allocation4 + $0x38] sm:$0xff]
        %v353 = vld [vmem:[#allocation4 + $0x40] sm:$0xff]
        %v354 = vld [vmem:[#allocation4 + $0x48] sm:$0xff]
        %v355 = vld [vmem:[#allocation4 + $0x50] sm:$0xff]
        %v356 = vld [vmem:[#allocation4 + $0x58] sm:$0xff]
        %v357 = vld [vmem:[#allocation4 + $0x60] sm:$0xff]
        %v358 = vld [vmem:[#allocation4 + $0x68] sm:$0xff]
        %v359 = vld [vmem:[#allocation4 + $0x70] sm:$0xff]
        %v360 = vld [vmem:[#allocation4 + $0x78] sm:$0xff]
        %v361 = vld [vmem:[%s2] sm:$0x1]
        %v362 = vld [vmem:[#allocation7] sm:$0xff]
        %v363 = vld [vmem:[#allocation7 + $0x8] sm:$0xff]
        %v364 = vld [vmem:[#allocation7 + $0x10] sm:$0xff]
        %v365 = vld [vmem:[#allocation7 + $0x18] sm:$0xff]
        %v366 = vld [vmem:[#allocation7 + $0x20] sm:$0xff]
        %v367 = vld [vmem:[#allocation7 + $0x28] sm:$0xff]
        %v368 = vld [vmem:[#allocation7 + $0x30] sm:$0xff]
        %v369 = vld [vmem:[#allocation7 + $0x38] sm:$0xff]
        %v370 = vld [vmem:[#allocation7 + $0x40] sm:$0xff]
        %v371 = vld [vmem:[#allocation7 + $0x48] sm:$0xff]
        %v372 = vld [vmem:[#allocation7 + $0x50] sm:$0xff]
        %v373 = vld [vmem:[#allocation7 + $0x58] sm:$0xff]
        %v374 = vld [vmem:[#allocation7 + $0x60] sm:$0xff]
        %v375 = vld [vmem:[#allocation7 + $0x68] sm:$0xff]
        %v376 = vld [vmem:[#allocation7 + $0x70] sm:$0xff]
        %v377 = vld [vmem:[#allocation7 + $0x78] sm:$0xff]
        %v378 = vld [vmem:[%s4] sm:$0x1]
        %s379 = sld [smem:[#allocation3]]
        %s380 = sld [smem:[#allocation9 + %s27]]
        %v381 = vld [vmem:[#allocation2] sm:$0xff]
        %v383 = vlaneseq
        %v384 = vshrl.u32 %v383, 7
        %v385 = vsub.s32 0, %v384
        %v386 = vrot.slane %v361, %v385
        %388 = vmatprep.subr.mxu0 0.0
        %389 = vmatpush1.msra.mxu0 %v345
        %390 = vmatprep.subr.mxu0 0.0
        %391 = vmatpush1.msra.mxu0 %v346
        %392 = vmatprep.subr.mxu0 0.0
        %393 = vmatpush1.msra.mxu0 %v347
        %394 = vmatprep.subr.mxu0 0.0
        %395 = vmatpush1.msra.mxu0 %v348
        %396 = vmatprep.subr.mxu0 0.0
        %397 = vmatpush1.msra.mxu0 %v349
        %398 = vmatprep.subr.mxu0 0.0
        %399 = vmatpush1.msra.mxu0 %v350
        %400 = vmatprep.subr.mxu0 0.0
        %401 = vmatpush1.msra.mxu0 %v351
        %402 = vmatprep.subr.mxu0 0.0
        %403 = vmatpush1.msra.mxu0 %v352
        %404 = vmatprep.subr.mxu0 0.0
        %405 = vmatpush1.msra.mxu0 %v353
        %406 = vmatprep.subr.mxu0 0.0
        %407 = vmatpush1.msra.mxu0 %v354
        %408 = vmatprep.subr.mxu0 0.0
        %409 = vmatpush1.msra.mxu0 %v355
        %410 = vmatprep.subr.mxu0 0.0
        %411 = vmatpush1.msra.mxu0 %v356
        %412 = vmatprep.subr.mxu0 0.0
        %413 = vmatpush1.msra.mxu0 %v357
        %414 = vmatprep.subr.mxu0 0.0
        %415 = vmatpush1.msra.mxu0 %v358
        %416 = vmatprep.subr.mxu0 0.0
        %417 = vmatpush1.msra.mxu0 %v359
        %418 = vmatprep.subr.mxu0 0.0
        %419 = vmatpush1.msra.mxu0 %v360
        %420 = vmatprep.subr.mxu0 0.0
        %421 = vmatpush1.msra.mxu0 0.0
        %422 = vmatprep.subr.mxu0 0.0
        %423 = vmatpush1.msra.mxu0 0.0
        %424 = vmatprep.subr.mxu0 0.0
        %425 = vmatpush1.msra.mxu0 0.0
        %426 = vmatprep.subr.mxu0 0.0
        %427 = vmatpush1.msra.mxu0 0.0
        %428 = vmatprep.subr.mxu0 0.0
        %429 = vmatpush1.msra.mxu0 0.0
        %430 = vmatprep.subr.mxu0 0.0
        %431 = vmatpush1.msra.mxu0 0.0
        %432 = vmatprep.subr.mxu0 0.0
        %433 = vmatpush1.msra.mxu0 0.0
        %434 = vmatprep.subr.mxu0 0.0
        %435 = vmatpush1.msra.mxu0 0.0
        %436 = vmatprep.subr.mxu0 0.0
        %437 = vmatpush1.msra.mxu0 0.0
        %438 = vmatprep.subr.mxu0 0.0
        %439 = vmatpush1.msra.mxu0 0.0
        %440 = vmatprep.subr.mxu0 0.0
        %441 = vmatpush1.msra.mxu0 0.0
        %442 = vmatprep.subr.mxu0 0.0
        %443 = vmatpush1.msra.mxu0 0.0
        %444 = vmatprep.subr.mxu0 0.0
        %445 = vmatpush1.msra.mxu0 0.0
        %446 = vmatprep.subr.mxu0 0.0
        %447 = vmatpush1.msra.mxu0 0.0
        %448 = vmatprep.subr.mxu0 0.0
        %449 = vmatpush1.msra.mxu0 0.0
        %450 = vmatprep.subr.mxu0 0.0
        %451 = vmatpush1.msra.mxu0 0.0
        %452 = vmatprep.mubr.f32.mxu0 0.0
        %453 = vmatmul.mubr.f32.gmra.mrb[0].mxu0 %v381
        %v454 = vpop.f32.mrb[0].mxu0
        %v455 = vadd.f32 %v386, %v454
        %v456 = vpop.f32.mrb[0].mxu0
        %457 = vdwg.mxu0
        %v459 = vlaneseq
        %v460 = vshrl.u32 %v459, 7
        %v461 = vsub.s32 0, %v460
        %v462 = vrot.slane %v378, %v461
        %464 = vmatprep.subr.mxu0 0.0
        %465 = vmatpush1.msra.mxu0 %v362
        %466 = vmatprep.subr.mxu0 0.0
        %467 = vmatpush1.msra.mxu0 %v363
        %468 = vmatprep.subr.mxu0 0.0
        %469 = vmatpush1.msra.mxu0 %v364
        %470 = vmatprep.subr.mxu0 0.0
        %471 = vmatpush1.msra.mxu0 %v365
        %472 = vmatprep.subr.mxu0 0.0
        %473 = vmatpush1.msra.mxu0 %v366
        %474 = vmatprep.subr.mxu0 0.0
        %475 = vmatpush1.msra.mxu0 %v367
        %476 = vmatprep.subr.mxu0 0.0
        %477 = vmatpush1.msra.mxu0 %v368
        %478 = vmatprep.subr.mxu0 0.0
        %479 = vmatpush1.msra.mxu0 %v369
        %480 = vmatprep.subr.mxu0 0.0
        %481 = vmatpush1.msra.mxu0 %v370
        %482 = vmatprep.subr.mxu0 0.0
        %483 = vmatpush1.msra.mxu0 %v371
        %484 = vmatprep.subr.mxu0 0.0
        %485 = vmatpush1.msra.mxu0 %v372
        %486 = vmatprep.subr.mxu0 0.0
        %487 = vmatpush1.msra.mxu0 %v373
        %488 = vmatprep.subr.mxu0 0.0
        %489 = vmatpush1.msra.mxu0 %v374
        %490 = vmatprep.subr.mxu0 0.0
        %491 = vmatpush1.msra.mxu0 %v375
        %492 = vmatprep.subr.mxu0 0.0
        %493 = vmatpush1.msra.mxu0 %v376
        %494 = vmatprep.subr.mxu0 0.0
        %495 = vmatpush1.msra.mxu0 %v377
        %496 = vmatprep.subr.mxu0 0.0
        %497 = vmatpush1.msra.mxu0 0.0
        %498 = vmatprep.subr.mxu0 0.0
        %499 = vmatpush1.msra.mxu0 0.0
        %500 = vmatprep.subr.mxu0 0.0
        %501 = vmatpush1.msra.mxu0 0.0
        %502 = vmatprep.subr.mxu0 0.0
        %503 = vmatpush1.msra.mxu0 0.0
        %504 = vmatprep.subr.mxu0 0.0
        %505 = vmatpush1.msra.mxu0 0.0
        %506 = vmatprep.subr.mxu0 0.0
        %507 = vmatpush1.msra.mxu0 0.0
        %508 = vmatprep.subr.mxu0 0.0
        %509 = vmatpush1.msra.mxu0 0.0
        %510 = vmatprep.subr.mxu0 0.0
        %511 = vmatpush1.msra.mxu0 0.0
        %512 = vmatprep.subr.mxu0 0.0
        %513 = vmatpush1.msra.mxu0 0.0
        %514 = vmatprep.subr.mxu0 0.0
        %515 = vmatpush1.msra.mxu0 0.0
        %516 = vmatprep.subr.mxu0 0.0
        %517 = vmatpush1.msra.mxu0 0.0
        %518 = vmatprep.subr.mxu0 0.0
        %519 = vmatpush1.msra.mxu0 0.0
        %520 = vmatprep.subr.mxu0 0.0
        %521 = vmatpush1.msra.mxu0 0.0
        %522 = vmatprep.subr.mxu0 0.0
        %523 = vmatpush1.msra.mxu0 0.0
        %524 = vmatprep.subr.mxu0 0.0
        %525 = vmatpush1.msra.mxu0 0.0
        %526 = vmatprep.subr.mxu0 0.0
        %527 = vmatpush1.msra.mxu0 0.0
        %528 = vmatprep.mubr.f32.mxu0 0.0
        %529 = vmatmul.mubr.f32.gmra.mrb[0].mxu0 %v455
        %v530 = vpop.f32.mrb[0].mxu0
        %v531 = vadd.f32 %v462, %v530
        %v532 = vpop.f32.mrb[0].mxu0
        %533 = vdwg.mxu0
        %v534 = vmul.f32 %v381, %v531
        %535 = vadd.xlane.f32.xlu0 %v534
        %v536 = vpop.xlane.xlu0 %535
        %v537 = vsub.f32 %v531, %v536
        %v538 = vmul.f32 %v381, %v537
        %v539 = vstv %s379
        %v540 = vmul.f32 %v539, %v538
        %s541 = smul.f32 %s380, 0.5
        %v542 = vstv %s541
        %v543 = vmul.f32 %v542, %v540
        %v544 = vadd.f32 %v381, %v543
        %545 = vmatprep.subr.mxu0 0.0
        %546 = vmatpush1.msra.mxu0 %v345
        %547 = vmatprep.subr.mxu0 0.0
        %548 = vmatpush1.msra.mxu0 %v346
        %549 = vmatprep.subr.mxu0 0.0
        %550 = vmatpush1.msra.mxu0 %v347
        %551 = vmatprep.subr.mxu0 0.0
        %552 = vmatpush1.msra.mxu0 %v348
        %553 = vmatprep.subr.mxu0 0.0
        %554 = vmatpush1.msra.mxu0 %v349
        %555 = vmatprep.subr.mxu0 0.0
        %556 = vmatpush1.msra.mxu0 %v350
        %557 = vmatprep.subr.mxu0 0.0
        %558 = vmatpush1.msra.mxu0 %v351
        %559 = vmatprep.subr.mxu0 0.0
        %560 = vmatpush1.msra.mxu0 %v352
        %561 = vmatprep.subr.mxu0 0.0
        %562 = vmatpush1.msra.mxu0 %v353
        %563 = vmatprep.subr.mxu0 0.0
        %564 = vmatpush1.msra.mxu0 %v354
        %565 = vmatprep.subr.mxu0 0.0
        %566 = vmatpush1.msra.mxu0 %v355
        %567 = vmatprep.subr.mxu0 0.0
        %568 = vmatpush1.msra.mxu0 %v356
        %569 = vmatprep.subr.mxu0 0.0
        %570 = vmatpush1.msra.mxu0 %v357
        %571 = vmatprep.subr.mxu0 0.0
        %572 = vmatpush1.msra.mxu0 %v358
        %573 = vmatprep.subr.mxu0 0.0
        %574 = vmatpush1.msra.mxu0 %v359
        %575 = vmatprep.subr.mxu0 0.0
        %576 = vmatpush1.msra.mxu0 %v360
        %577 = vmatprep.subr.mxu0 0.0
        %578 = vmatpush1.msra.mxu0 0.0
        %579 = vmatprep.subr.mxu0 0.0
        %580 = vmatpush1.msra.mxu0 0.0
        %581 = vmatprep.subr.mxu0 0.0
        %582 = vmatpush1.msra.mxu0 0.0
        %583 = vmatprep.subr.mxu0 0.0
        %584 = vmatpush1.msra.mxu0 0.0
        %585 = vmatprep.subr.mxu0 0.0
        %586 = vmatpush1.msra.mxu0 0.0
        %587 = vmatprep.subr.mxu0 0.0
        %588 = vmatpush1.msra.mxu0 0.0
        %589 = vmatprep.subr.mxu0 0.0
        %590 = vmatpush1.msra.mxu0 0.0
        %591 = vmatprep.subr.mxu0 0.0
        %592 = vmatpush1.msra.mxu0 0.0
        %593 = vmatprep.subr.mxu0 0.0
        %594 = vmatpush1.msra.mxu0 0.0
        %595 = vmatprep.subr.mxu0 0.0
        %596 = vmatpush1.msra.mxu0 0.0
        %597 = vmatprep.subr.mxu0 0.0
        %598 = vmatpush1.msra.mxu0 0.0
        %599 = vmatprep.subr.mxu0 0.0
        %600 = vmatpush1.msra.mxu0 0.0
        %601 = vmatprep.subr.mxu0 0.0
        %602 = vmatpush1.msra.mxu0 0.0
        %603 = vmatprep.subr.mxu0 0.0
        %604 = vmatpush1.msra.mxu0 0.0
        %605 = vmatprep.subr.mxu0 0.0
        %606 = vmatpush1.msra.mxu0 0.0
        %607 = vmatprep.subr.mxu0 0.0
        %608 = vmatpush1.msra.mxu0 0.0
        %609 = vmatprep.mubr.f32.mxu0 0.0
        %610 = vmatmul.mubr.f32.gmra.mrb[0].mxu0 %v544
        %v611 = vpop.f32.mrb[0].mxu0
        %v612 = vadd.f32 %v386, %v611
        %v613 = vpop.f32.mrb[0].mxu0
        %614 = vdwg.mxu0
        %615 = vmatprep.subr.mxu0 0.0
        %616 = vmatpush1.msra.mxu0 %v362
        %617 = vmatprep.subr.mxu0 0.0
        %618 = vmatpush1.msra.mxu0 %v363
        %619 = vmatprep.subr.mxu0 0.0
        %620 = vmatpush1.msra.mxu0 %v364
        %621 = vmatprep.subr.mxu0 0.0
        %622 = vmatpush1.msra.mxu0 %v365
        %623 = vmatprep.subr.mxu0 0.0
        %624 = vmatpush1.msra.mxu0 %v366
        %625 = vmatprep.subr.mxu0 0.0
        %626 = vmatpush1.msra.mxu0 %v367
        %627 = vmatprep.subr.mxu0 0.0
        %628 = vmatpush1.msra.mxu0 %v368
        %629 = vmatprep.subr.mxu0 0.0
        %630 = vmatpush1.msra.mxu0 %v369
        %631 = vmatprep.subr.mxu0 0.0
        %632 = vmatpush1.msra.mxu0 %v370
        %633 = vmatprep.subr.mxu0 0.0
        %634 = vmatpush1.msra.mxu0 %v371
        %635 = vmatprep.subr.mxu0 0.0
        %636 = vmatpush1.msra.mxu0 %v372
        %637 = vmatprep.subr.mxu0 0.0
        %638 = vmatpush1.msra.mxu0 %v373
        %639 = vmatprep.subr.mxu0 0.0
        %640 = vmatpush1.msra.mxu0 %v374
        %641 = vmatprep.subr.mxu0 0.0
        %642 = vmatpush1.msra.mxu0 %v375
        %643 = vmatprep.subr.mxu0 0.0
        %644 = vmatpush1.msra.mxu0 %v376
        %645 = vmatprep.subr.mxu0 0.0
        %646 = vmatpush1.msra.mxu0 %v377
        %647 = vmatprep.subr.mxu0 0.0
        %648 = vmatpush1.msra.mxu0 0.0
        %649 = vmatprep.subr.mxu0 0.0
        %650 = vmatpush1.msra.mxu0 0.0
        %651 = vmatprep.subr.mxu0 0.0
        %652 = vmatpush1.msra.mxu0 0.0
        %653 = vmatprep.subr.mxu0 0.0
        %654 = vmatpush1.msra.mxu0 0.0
        %655 = vmatprep.subr.mxu0 0.0
        %656 = vmatpush1.msra.mxu0 0.0
        %657 = vmatprep.subr.mxu0 0.0
        %658 = vmatpush1.msra.mxu0 0.0
        %659 = vmatprep.subr.mxu0 0.0
        %660 = vmatpush1.msra.mxu0 0.0
        %661 = vmatprep.subr.mxu0 0.0
        %662 = vmatpush1.msra.mxu0 0.0
        %663 = vmatprep.subr.mxu0 0.0
        %664 = vmatpush1.msra.mxu0 0.0
        %665 = vmatprep.subr.mxu0 0.0
        %666 = vmatpush1.msra.mxu0 0.0
        %667 = vmatprep.subr.mxu0 0.0
        %668 = vmatpush1.msra.mxu0 0.0
        %669 = vmatprep.subr.mxu0 0.0
        %670 = vmatpush1.msra.mxu0 0.0
        %671 = vmatprep.subr.mxu0 0.0
        %672 = vmatpush1.msra.mxu0 0.0
        %673 = vmatprep.subr.mxu0 0.0
        %674 = vmatpush1.msra.mxu0 0.0
        %675 = vmatprep.subr.mxu0 0.0
        %676 = vmatpush1.msra.mxu0 0.0
        %677 = vmatprep.subr.mxu0 0.0
        %678 = vmatpush1.msra.mxu0 0.0
        %679 = vmatprep.mubr.f32.mxu0 0.0
        %680 = vmatmul.mubr.f32.gmra.mrb[0].mxu0 %v612
        %v681 = vpop.f32.mrb[0].mxu0
        %v682 = vadd.f32 %v462, %v681
        %v683 = vpop.f32.mrb[0].mxu0
        %684 = vdwg.mxu0
        %v685 = vmul.f32 %v544, %v682
        %686 = vadd.xlane.f32.xlu0 %v685
        %v687 = vpop.xlane.xlu0 %686
        %v688 = vsub.f32 %v682, %v687
        %v689 = vmul.f32 %v544, %v688
        %v690 = vmul.f32 %v539, %v689
        %v691 = vmul.f32 %v542, %v690
        %v692 = vadd.f32 %v381, %v691
        %693 = vmatprep.subr.mxu0 0.0
        %694 = vmatpush1.msra.mxu0 %v345
        %695 = vmatprep.subr.mxu0 0.0
        %696 = vmatpush1.msra.mxu0 %v346
        %697 = vmatprep.subr.mxu0 0.0
        %698 = vmatpush1.msra.mxu0 %v347
        %699 = vmatprep.subr.mxu0 0.0
        %700 = vmatpush1.msra.mxu0 %v348
        %701 = vmatprep.subr.mxu0 0.0
        %702 = vmatpush1.msra.mxu0 %v349
        %703 = vmatprep.subr.mxu0 0.0
        %704 = vmatpush1.msra.mxu0 %v350
        %705 = vmatprep.subr.mxu0 0.0
        %706 = vmatpush1.msra.mxu0 %v351
        %707 = vmatprep.subr.mxu0 0.0
        %708 = vmatpush1.msra.mxu0 %v352
        %709 = vmatprep.subr.mxu0 0.0
        %710 = vmatpush1.msra.mxu0 %v353
        %711 = vmatprep.subr.mxu0 0.0
        %712 = vmatpush1.msra.mxu0 %v354
        %713 = vmatprep.subr.mxu0 0.0
        %714 = vmatpush1.msra.mxu0 %v355
        %715 = vmatprep.subr.mxu0 0.0
        %716 = vmatpush1.msra.mxu0 %v356
        %717 = vmatprep.subr.mxu0 0.0
        %718 = vmatpush1.msra.mxu0 %v357
        %719 = vmatprep.subr.mxu0 0.0
        %720 = vmatpush1.msra.mxu0 %v358
        %721 = vmatprep.subr.mxu0 0.0
        %722 = vmatpush1.msra.mxu0 %v359
        %723 = vmatprep.subr.mxu0 0.0
        %724 = vmatpush1.msra.mxu0 %v360
        %725 = vmatprep.subr.mxu0 0.0
        %726 = vmatpush1.msra.mxu0 0.0
        %727 = vmatprep.subr.mxu0 0.0
        %728 = vmatpush1.msra.mxu0 0.0
        %729 = vmatprep.subr.mxu0 0.0
        %730 = vmatpush1.msra.mxu0 0.0
        %731 = vmatprep.subr.mxu0 0.0
        %732 = vmatpush1.msra.mxu0 0.0
        %733 = vmatprep.subr.mxu0 0.0
        %734 = vmatpush1.msra.mxu0 0.0
        %735 = vmatprep.subr.mxu0 0.0
        %736 = vmatpush1.msra.mxu0 0.0
        %737 = vmatprep.subr.mxu0 0.0
        %738 = vmatpush1.msra.mxu0 0.0
        %739 = vmatprep.subr.mxu0 0.0
        %740 = vmatpush1.msra.mxu0 0.0
        %741 = vmatprep.subr.mxu0 0.0
        %742 = vmatpush1.msra.mxu0 0.0
        %743 = vmatprep.subr.mxu0 0.0
        %744 = vmatpush1.msra.mxu0 0.0
        %745 = vmatprep.subr.mxu0 0.0
        %746 = vmatpush1.msra.mxu0 0.0
        %747 = vmatprep.subr.mxu0 0.0
        %748 = vmatpush1.msra.mxu0 0.0
        %749 = vmatprep.subr.mxu0 0.0
        %750 = vmatpush1.msra.mxu0 0.0
        %751 = vmatprep.subr.mxu0 0.0
        %752 = vmatpush1.msra.mxu0 0.0
        %753 = vmatprep.subr.mxu0 0.0
        %754 = vmatpush1.msra.mxu0 0.0
        %755 = vmatprep.subr.mxu0 0.0
        %756 = vmatpush1.msra.mxu0 0.0
        %757 = vmatprep.mubr.f32.mxu0 0.0
        %758 = vmatmul.mubr.f32.gmra.mrb[0].mxu0 %v692
        %v759 = vpop.f32.mrb[0].mxu0
        %v760 = vadd.f32 %v386, %v759
        %v761 = vpop.f32.mrb[0].mxu0
        %762 = vdwg.mxu0
        %763 = vmatprep.subr.mxu0 0.0
        %764 = vmatpush1.msra.mxu0 %v362
        %765 = vmatprep.subr.mxu0 0.0
        %766 = vmatpush1.msra.mxu0 %v363
        %767 = vmatprep.subr.mxu0 0.0
        %768 = vmatpush1.msra.mxu0 %v364
        %769 = vmatprep.subr.mxu0 0.0
        %770 = vmatpush1.msra.mxu0 %v365
        %771 = vmatprep.subr.mxu0 0.0
        %772 = vmatpush1.msra.mxu0 %v366
        %773 = vmatprep.subr.mxu0 0.0
        %774 = vmatpush1.msra.mxu0 %v367
        %775 = vmatprep.subr.mxu0 0.0
        %776 = vmatpush1.msra.mxu0 %v368
        %777 = vmatprep.subr.mxu0 0.0
        %778 = vmatpush1.msra.mxu0 %v369
        %779 = vmatprep.subr.mxu0 0.0
        %780 = vmatpush1.msra.mxu0 %v370
        %781 = vmatprep.subr.mxu0 0.0
        %782 = vmatpush1.msra.mxu0 %v371
        %783 = vmatprep.subr.mxu0 0.0
        %784 = vmatpush1.msra.mxu0 %v372
        %785 = vmatprep.subr.mxu0 0.0
        %786 = vmatpush1.msra.mxu0 %v373
        %787 = vmatprep.subr.mxu0 0.0
        %788 = vmatpush1.msra.mxu0 %v374
        %789 = vmatprep.subr.mxu0 0.0
        %790 = vmatpush1.msra.mxu0 %v375
        %791 = vmatprep.subr.mxu0 0.0
        %792 = vmatpush1.msra.mxu0 %v376
        %793 = vmatprep.subr.mxu0 0.0
        %794 = vmatpush1.msra.mxu0 %v377
        %795 = vmatprep.subr.mxu0 0.0
        %796 = vmatpush1.msra.mxu0 0.0
        %797 = vmatprep.subr.mxu0 0.0
        %798 = vmatpush1.msra.mxu0 0.0
        %799 = vmatprep.subr.mxu0 0.0
        %800 = vmatpush1.msra.mxu0 0.0
        %801 = vmatprep.subr.mxu0 0.0
        %802 = vmatpush1.msra.mxu0 0.0
        %803 = vmatprep.subr.mxu0 0.0
        %804 = vmatpush1.msra.mxu0 0.0
        %805 = vmatprep.subr.mxu0 0.0
        %806 = vmatpush1.msra.mxu0 0.0
        %807 = vmatprep.subr.mxu0 0.0
        %808 = vmatpush1.msra.mxu0 0.0
        %809 = vmatprep.subr.mxu0 0.0
        %810 = vmatpush1.msra.mxu0 0.0
        %811 = vmatprep.subr.mxu0 0.0
        %812 = vmatpush1.msra.mxu0 0.0
        %813 = vmatprep.subr.mxu0 0.0
        %814 = vmatpush1.msra.mxu0 0.0
        %815 = vmatprep.subr.mxu0 0.0
        %816 = vmatpush1.msra.mxu0 0.0
        %817 = vmatprep.subr.mxu0 0.0
        %818 = vmatpush1.msra.mxu0 0.0
        %819 = vmatprep.subr.mxu0 0.0
        %820 = vmatpush1.msra.mxu0 0.0
        %821 = vmatprep.subr.mxu0 0.0
        %822 = vmatpush1.msra.mxu0 0.0
        %823 = vmatprep.subr.mxu0 0.0
        %824 = vmatpush1.msra.mxu0 0.0
        %825 = vmatprep.subr.mxu0 0.0
        %826 = vmatpush1.msra.mxu0 0.0
        %827 = vmatprep.mubr.f32.mxu0 0.0
        %828 = vmatmul.mubr.f32.gmra.mrb[0].mxu0 %v760
        %v829 = vpop.f32.mrb[0].mxu0
        %v830 = vadd.f32 %v462, %v829
        %v831 = vpop.f32.mrb[0].mxu0
        %832 = vdwg.mxu0
        %v833 = vmul.f32 %v692, %v830
        %834 = vadd.xlane.f32.xlu0 %v833
        %v835 = vpop.xlane.xlu0 %834
        %v836 = vsub.f32 %v830, %v835
        %v837 = vmul.f32 %v692, %v836
        %v838 = vmul.f32 %v539, %v837
        %v839 = vstv %s380
        %v840 = vmul.f32 %v839, %v838
        %v841 = vadd.f32 %v381, %v840
        %842 = vmatprep.subr.mxu0 0.0
        %843 = vmatpush1.msra.mxu0 %v345
        %844 = vmatprep.subr.mxu0 0.0
        %845 = vmatpush1.msra.mxu0 %v346
        %846 = vmatprep.subr.mxu0 0.0
        %847 = vmatpush1.msra.mxu0 %v347
        %848 = vmatprep.subr.mxu0 0.0
        %849 = vmatpush1.msra.mxu0 %v348
        %850 = vmatprep.subr.mxu0 0.0
        %851 = vmatpush1.msra.mxu0 %v349
        %852 = vmatprep.subr.mxu0 0.0
        %853 = vmatpush1.msra.mxu0 %v350
        %854 = vmatprep.subr.mxu0 0.0
        %855 = vmatpush1.msra.mxu0 %v351
        %856 = vmatprep.subr.mxu0 0.0
        %857 = vmatpush1.msra.mxu0 %v352
        %858 = vmatprep.subr.mxu0 0.0
        %859 = vmatpush1.msra.mxu0 %v353
        %860 = vmatprep.subr.mxu0 0.0
        %861 = vmatpush1.msra.mxu0 %v354
        %862 = vmatprep.subr.mxu0 0.0
        %863 = vmatpush1.msra.mxu0 %v355
        %864 = vmatprep.subr.mxu0 0.0
        %865 = vmatpush1.msra.mxu0 %v356
        %866 = vmatprep.subr.mxu0 0.0
        %867 = vmatpush1.msra.mxu0 %v357
        %868 = vmatprep.subr.mxu0 0.0
        %869 = vmatpush1.msra.mxu0 %v358
        %870 = vmatprep.subr.mxu0 0.0
        %871 = vmatpush1.msra.mxu0 %v359
        %872 = vmatprep.subr.mxu0 0.0
        %873 = vmatpush1.msra.mxu0 %v360
        %874 = vmatprep.subr.mxu0 0.0
        %875 = vmatpush1.msra.mxu0 0.0
        %876 = vmatprep.subr.mxu0 0.0
        %877 = vmatpush1.msra.mxu0 0.0
        %878 = vmatprep.subr.mxu0 0.0
        %879 = vmatpush1.msra.mxu0 0.0
        %880 = vmatprep.subr.mxu0 0.0
        %881 = vmatpush1.msra.mxu0 0.0
        %882 = vmatprep.subr.mxu0 0.0
        %883 = vmatpush1.msra.mxu0 0.0
        %884 = vmatprep.subr.mxu0 0.0
        %885 = vmatpush1.msra.mxu0 0.0
        %886 = vmatprep.subr.mxu0 0.0
        %887 = vmatpush1.msra.mxu0 0.0
        %888 = vmatprep.subr.mxu0 0.0
        %889 = vmatpush1.msra.mxu0 0.0
        %890 = vmatprep.subr.mxu0 0.0
        %891 = vmatpush1.msra.mxu0 0.0
        %892 = vmatprep.subr.mxu0 0.0
        %893 = vmatpush1.msra.mxu0 0.0
        %894 = vmatprep.subr.mxu0 0.0
        %895 = vmatpush1.msra.mxu0 0.0
        %896 = vmatprep.subr.mxu0 0.0
        %897 = vmatpush1.msra.mxu0 0.0
        %898 = vmatprep.subr.mxu0 0.0
        %899 = vmatpush1.msra.mxu0 0.0
        %900 = vmatprep.subr.mxu0 0.0
        %901 = vmatpush1.msra.mxu0 0.0
        %902 = vmatprep.subr.mxu0 0.0
        %903 = vmatpush1.msra.mxu0 0.0
        %904 = vmatprep.subr.mxu0 0.0
        %905 = vmatpush1.msra.mxu0 0.0
        %906 = vmatprep.mubr.f32.mxu0 0.0
        %907 = vmatmul.mubr.f32.gmra.mrb[0].mxu0 %v841
        %v908 = vpop.f32.mrb[0].mxu0
        %v909 = vadd.f32 %v386, %v908
        %v910 = vpop.f32.mrb[0].mxu0
        %911 = vdwg.mxu0
        %912 = vmatprep.subr.mxu0 0.0
        %913 = vmatpush1.msra.mxu0 %v362
        %914 = vmatprep.subr.mxu0 0.0
        %915 = vmatpush1.msra.mxu0 %v363
        %916 = vmatprep.subr.mxu0 0.0
        %917 = vmatpush1.msra.mxu0 %v364
        %918 = vmatprep.subr.mxu0 0.0
        %919 = vmatpush1.msra.mxu0 %v365
        %920 = vmatprep.subr.mxu0 0.0
        %921 = vmatpush1.msra.mxu0 %v366
        %922 = vmatprep.subr.mxu0 0.0
        %923 = vmatpush1.msra.mxu0 %v367
        %924 = vmatprep.subr.mxu0 0.0
        %925 = vmatpush1.msra.mxu0 %v368
        %926 = vmatprep.subr.mxu0 0.0
        %927 = vmatpush1.msra.mxu0 %v369
        %928 = vmatprep.subr.mxu0 0.0
        %929 = vmatpush1.msra.mxu0 %v370
        %930 = vmatprep.subr.mxu0 0.0
        %931 = vmatpush1.msra.mxu0 %v371
        %932 = vmatprep.subr.mxu0 0.0
        %933 = vmatpush1.msra.mxu0 %v372
        %934 = vmatprep.subr.mxu0 0.0
        %935 = vmatpush1.msra.mxu0 %v373
        %936 = vmatprep.subr.mxu0 0.0
        %937 = vmatpush1.msra.mxu0 %v374
        %938 = vmatprep.subr.mxu0 0.0
        %939 = vmatpush1.msra.mxu0 %v375
        %940 = vmatprep.subr.mxu0 0.0
        %941 = vmatpush1.msra.mxu0 %v376
        %942 = vmatprep.subr.mxu0 0.0
        %943 = vmatpush1.msra.mxu0 %v377
        %944 = vmatprep.subr.mxu0 0.0
        %945 = vmatpush1.msra.mxu0 0.0
        %946 = vmatprep.subr.mxu0 0.0
        %947 = vmatpush1.msra.mxu0 0.0
        %948 = vmatprep.subr.mxu0 0.0
        %949 = vmatpush1.msra.mxu0 0.0
        %950 = vmatprep.subr.mxu0 0.0
        %951 = vmatpush1.msra.mxu0 0.0
        %952 = vmatprep.subr.mxu0 0.0
        %953 = vmatpush1.msra.mxu0 0.0
        %954 = vmatprep.subr.mxu0 0.0
        %955 = vmatpush1.msra.mxu0 0.0
        %956 = vmatprep.subr.mxu0 0.0
        %957 = vmatpush1.msra.mxu0 0.0
        %958 = vmatprep.subr.mxu0 0.0
        %959 = vmatpush1.msra.mxu0 0.0
        %960 = vmatprep.subr.mxu0 0.0
        %961 = vmatpush1.msra.mxu0 0.0
        %962 = vmatprep.subr.mxu0 0.0
        %963 = vmatpush1.msra.mxu0 0.0
        %964 = vmatprep.subr.mxu0 0.0
        %965 = vmatpush1.msra.mxu0 0.0
        %966 = vmatprep.subr.mxu0 0.0
        %967 = vmatpush1.msra.mxu0 0.0
        %968 = vmatprep.subr.mxu0 0.0
        %969 = vmatpush1.msra.mxu0 0.0
        %970 = vmatprep.subr.mxu0 0.0
        %971 = vmatpush1.msra.mxu0 0.0
        %972 = vmatprep.subr.mxu0 0.0
        %973 = vmatpush1.msra.mxu0 0.0
        %974 = vmatprep.subr.mxu0 0.0
        %975 = vmatpush1.msra.mxu0 0.0
        %976 = vmatprep.mubr.f32.mxu0 0.0
        %977 = vmatmul.mubr.f32.gmra.mrb[0].mxu0 %v909
        %v978 = vpop.f32.mrb[0].mxu0
        %v979 = vadd.f32 %v462, %v978
        %v980 = vpop.f32.mrb[0].mxu0
        %981 = vdwg.mxu0
        %v982 = vmul.f32 %v841, %v979
        %983 = vadd.xlane.f32.xlu0 %v982
        %v984 = vpop.xlane.xlu0 %983
        %v985 = vsub.f32 %v979, %v984
        %v986 = vmul.f32 %v841, %v985
        %v987 = vmul.f32 %v539, %v986
        %v988 = vrcp.pop 6.0
        %s989 = vtos %v988
        %s990 = smul.f32 %s380, %s989
        %v991 = vmul.f32 %v690, 2.0
        %v992 = vadd.f32 %v540, %v991
        %v993 = vmul.f32 %v838, 2.0
        %v994 = vadd.f32 %v992, %v993
        %v995 = vadd.f32 %v994, %v987
        %v996 = vstv %s990
        %v997 = vmul.f32 %v996, %v995
        %v998 = vadd.f32 %v381, %v997
        %999 = vst [vmem:[#allocation2] sm:$0xff] %v998
        %1000 = vst [vmem:[%s338] sm:$0xff] %v998
        %p1001 = scmp.lt.s32.totalorder %s27, 3
        %s1002 = scalar_select %p1001, %s27, 3
        %p1003 = scmp.lt.s32.totalorder %s26, 0
        %s1004 = scalar_select %p1003, %s26, 0
        %s1005 = sadd.s32 %s1004, %s1002
        %s1006 = smul.addr %s1005, 8
        %s1007 = scalar_lea.vmem %s7, %s1006
        // Predicated region
        $region65: #{cnode2_fn_fitness_forward.1} parent=47 // pred_check
          %p1008 = pneg %p206
        $region66: #{cnode2_fn_fitness_forward.1} parent=47 // pred_check_branch
          %1010 = sbr.rel (%p1008) target = $region68
        $region67: #{cnode2_fn_fitness_forward.1} parent=47 // pred_region
          _
        $region68: #{cnode2_fn_fitness_forward.1} parent=47 // pred_fallthru
          _
      $region48: #{cnode2_fn_fitness_forward.1} parent=5 // pred_fallthru
        _
      %p1011 = scmp.le.s32.totalorder 2, %s17
      // Predicated region
      $region69: #{cnode2_fn_fitness_forward.1} parent=5 // pred_check
        %p1012 = pneg %p1011
      $region70: #{cnode2_fn_fitness_forward.1} parent=5 // pred_check_branch
        %1014 = sbr.rel (%p1012) target = $region72
      $region71: #{cnode2_fn_fitness_forward.1} parent=5 // pred_region
        %s1015 = ssub.s32 %s17, 2
        // Predicated region
        $region73: #{cnode2_fn_fitness_forward.1} parent=71 // pred_check
          %p1016 = pneg %p212
        $region74: #{cnode2_fn_fitness_forward.1} parent=71 // pred_check_branch
          %1018 = sbr.rel (%p1016) target = $region76
        $region75: #{cnode2_fn_fitness_forward.1} parent=71 // pred_region
          %p1019 = scmp.lt.s32.totalorder %s29, 3
          %s1020 = scalar_select %p1019, %s29, 3
          %p1021 = scmp.lt.s32.totalorder %s28, 0
          %s1022 = scalar_select %p1021, %s28, 0
          %s1023 = sadd.s32 %s1022, %s1020
          %s1024 = smul.addr %s1023, 8
          %s1025 = scalar_lea.vmem %s7, %s1024
        $region76: #{cnode2_fn_fitness_forward.1} parent=71 // pred_fallthru
          _
      $region72: #{cnode2_fn_fitness_forward.1} parent=5 // pred_fallthru
        _
    $region6: #{cnode2_fn_fitness_forward.1} parent=1 // loop_footer
      %s21 = sadd.s32 1, %s17
    $region7: #{cnode2_fn_fitness_forward.1} parent=1 // loop_footer_branch
      %16 = sbr.rel target = $region3
    $region8: #{cnode2_fn_fitness_forward.1} parent=1 // loop_exit
      _
    %1026 = vsyncpa [#allocation5], 1
    %s1027 = scalar_lea.sflag [#allocation5], 1
    %1028 = vsyncpa %s1027, 1
    %1029 = vsyncpa [#allocation8], 1
    %1030 = vsyncpa [#allocation6], 1
    %s1031 = scalar_lea.sflag [#allocation6], 1
    %1032 = vsyncpa %s1031, 1

</llo_original>
